<compile_context>
chip_gen: v5e
topology: v5e:2x2
jax: 0.10.0
libtpu: 0.0.40
codegen_flags: <defaults>
</compile_context>

<pallas_src>
import functools

import jax
import jax.numpy as jnp
from jax.experimental import pallas as pl
from jax.experimental.pallas import tpu as pltpu

_EPS = 1e-5


def _round_up(x, m):
    return ((x + m - 1) // m) * m


def _fused_kernel(x_ref, w1_ref, b1_ref, w2_ref, b2_ref, w3_ref, b3_ref,
                  o_ref, acc_ref):
    """One grid step = (batch tile i, channel c).

    x_ref  : (1, TM, HW)  f32   channel-c slab of the batch tile
    w1_ref : (1, HW, 128) bf16  channel-c rows of fc1 weight (out dim padded)
    b1_ref : (1, 128)     f32
    w2_ref : (128, 128)   bf16
    b2_ref : (1, 128)     f32
    w3_ref : (1, 128)     f32   fc3 weight as a row (VPU mul + lane reduce)
    b3_ref : (1, 1)       f32
    o_ref  : (TM, 1)      f32
    acc_ref: (TM, 128)    f32   fc1 pre-activation accumulator (VMEM scratch)
    """
    c = pl.program_id(1)
    last_c = pl.num_programs(1) - 1

    # ---- InstanceNorm2d for this channel: per-row mean/var over H*W (lanes) ----
    xc = x_ref[0].astype(jnp.float32)                       # (TM, HW)
    mean = jnp.mean(xc, axis=1, keepdims=True)
    cen = xc - mean
    var = jnp.mean(cen * cen, axis=1, keepdims=True)
    xn = cen * jax.lax.rsqrt(var + _EPS)

    # ---- fc1 partial product for this channel (MXU: bf16 in, f32 accumulate) ----
    part = jnp.dot(xn.astype(jnp.bfloat16), w1_ref[0],
                   preferred_element_type=jnp.float32)      # (TM, 128)

    @pl.when(c == 0)
    def _():
        acc_ref[...] = part

    @pl.when(c != 0)
    def _():
        acc_ref[...] = acc_ref[...] + part

    # ---- finalize once per batch tile: relu -> fc2 -> relu -> fc3 -> store ----
    @pl.when(c == last_c)
    def _():
        h1 = jnp.maximum(acc_ref[...] + b1_ref[...], 0.0)   # (TM, 128) f32
        h2 = jnp.dot(h1.astype(jnp.bfloat16), w2_ref[...],
                     preferred_element_type=jnp.float32) + b2_ref[...]
        h2 = jnp.maximum(h2, 0.0)                           # (TM, 128) f32
        # fc3 has a single output unit: VPU multiply + XLU lane reduction
        # instead of wasting an MXU pass on a 1-wide matmul.
        h3 = jnp.sum(h2 * w3_ref[...], axis=1, keepdims=True) + b3_ref[...]
        o_ref[...] = h3.astype(o_ref.dtype)


@functools.partial(jax.jit, static_argnames=("im_size",))
def model_forward(x_nchw, prepared, im_size):
    n = x_nchw.shape[0]
    hw = im_size * im_size
    d = 3 * hw

    tm = 128 if n >= 128 else _round_up(n, 8)
    n_pad = _round_up(n, tm)

    # NCHW -> (3, N_pad, H*W); zero-padded batch rows normalize to 0 (no NaNs)
    # and are sliced off at the end.
    x = x_nchw.reshape(n, 3, hw)
    if n_pad != n:
        x = jnp.pad(x, ((0, n_pad - n), (0, 0), (0, 0)))
    x_t = jnp.transpose(x, (1, 0, 2))                       # (3, N_pad, HW)

    grid = (n_pad // tm, 3)
    flops = (2 * n_pad * d * 128 + 2 * n_pad * 128 * 128
             + 8 * n_pad * d + 4 * n_pad * 128)
    bytes_accessed = (n_pad * d * 4 + d * 128 * 2 + 128 * 128 * 2
                      + 3 * 128 * 4 + 4 + n_pad * 4)

    out = pl.pallas_call(
        _fused_kernel,
        out_shape=jax.ShapeDtypeStruct((n_pad, 1), jnp.float32),
        grid_spec=pltpu.PrefetchScalarGridSpec(
            num_scalar_prefetch=0,
            grid=grid,
            in_specs=[
                pl.BlockSpec((1, tm, hw), lambda i, c: (c, i, 0)),    # x_t
                pl.BlockSpec((1, hw, 128), lambda i, c: (c, 0, 0)),   # w1 (per ch)
                pl.BlockSpec((1, 128), lambda i, c: (0, 0)),          # b1
                pl.BlockSpec((128, 128), lambda i, c: (0, 0)),        # w2
                pl.BlockSpec((1, 128), lambda i, c: (0, 0)),          # b2
                pl.BlockSpec((1, 128), lambda i, c: (0, 0)),          # w3 row
                pl.BlockSpec((1, 1), lambda i, c: (0, 0)),            # b3
            ],
            out_specs=pl.BlockSpec((tm, 1), lambda i, c: (i, 0)),
            scratch_shapes=[pltpu.VMEM((tm, 128), jnp.float32)],
        ),
        compiler_params=pltpu.CompilerParams(
            dimension_semantics=("parallel", "arbitrary")),
        cost_estimate=pl.CostEstimate(flops=flops, transcendentals=3 * n_pad,
                                      bytes_accessed=bytes_accessed),
    )(x_t, prepared["w1"], prepared["b1"], prepared["w2"], prepared["b2"],
      prepared["w3"], prepared["b3"])
    return out[:n]


# ----------------------------------------------------------------------------
# Parameter init (matches torch xavier_uniform_ with gain=0.1*calculate_gain
# ('relu')) and one-time layout prep for the kernel.
# ----------------------------------------------------------------------------
def xavier_uniform(key, fan_in, fan_out, gain=1.0):
    bound = gain * (6.0 / (fan_in + fan_out)) ** 0.5
    return jax.random.uniform(key, (fan_in, fan_out), jnp.float32, -bound, bound)


def init_params(key, im_size):
    d = 3 * im_size * im_size
    k1, k2, k3 = jax.random.split(key, 3)
    gain = 0.1 * (2.0 ** 0.5)  # 0.1 * calculate_gain('relu')
    return {
        "w1": xavier_uniform(k1, d, 120, gain),
        "b1": jnp.zeros((120,), jnp.float32),
        "w2": xavier_uniform(k2, 120, 60, gain),
        "b2": jnp.zeros((60,), jnp.float32),
        "w3": xavier_uniform(k3, 60, 1, gain),
        "b3": jnp.zeros((1,), jnp.float32),
    }


def prepare_params(params, im_size):
    """Pad hidden dims to 128 lanes, split fc1 per channel, cast MXU operands
    to bf16 (biases and the fc3 row stay f32). Done once, outside the jit."""
    hw = im_size * im_size
    w1 = params["w1"].reshape(3, hw, 120)
    w1 = jnp.pad(w1, ((0, 0), (0, 0), (0, 8))).astype(jnp.bfloat16)      # (3,HW,128)
    b1 = jnp.pad(params["b1"], (0, 8)).reshape(1, 128)                    # (1,128)
    w2 = jnp.pad(params["w2"], ((0, 8), (0, 68))).astype(jnp.bfloat16)    # (128,128)
    b2 = jnp.pad(params["b2"], (0, 68)).reshape(1, 128)                   # (1,128)
    w3 = jnp.pad(params["w3"].reshape(1, 60), ((0, 0), (0, 68)))          # (1,128)
    b3 = params["b3"].reshape(1, 1)                                       # (1,1)
    return {"w1": w1, "b1": b1, "w2": w2, "b2": b2, "w3": w3, "b3": b3}


if __name__ == "__main__":
    im_size = 8
    batch = 2
    key = jax.random.PRNGKey(0)
    kx, kp = jax.random.split(key)
    x = jax.random.normal(kx, (batch, 3, im_size, im_size), jnp.float32)
    params = init_params(kp, im_size)
    prepared = prepare_params(params, im_size)

    out = model_forward(x, prepared, im_size)
    jax.block_until_ready(out)
    assert out.shape == (batch, 1), out.shape

    # Reference in plain JAX (same bf16-operand / f32-accumulate matmul recipe).
    mean = jnp.mean(x, axis=(2, 3), keepdims=True)
    var = jnp.mean((x - mean) ** 2, axis=(2, 3), keepdims=True)
    xr = ((x - mean) * jax.lax.rsqrt(var + _EPS)).reshape(batch, -1)
    h1 = jnp.maximum(
        jnp.dot(xr.astype(jnp.bfloat16), params["w1"].astype(jnp.bfloat16),
                preferred_element_type=jnp.float32) + params["b1"], 0.0)
    h2 = jnp.maximum(
        jnp.dot(h1.astype(jnp.bfloat16), params["w2"].astype(jnp.bfloat16),
                preferred_element_type=jnp.float32) + params["b2"], 0.0)
    ref = h2 @ params["w3"] + params["b3"]

    assert jnp.allclose(out, ref, atol=2e-3, rtol=2e-3), (out, ref)
    print("KERNEL_OK")
</pallas_src>

<mosaic_0001>
module attributes {stable_mosaic.version = 11 : i64} {
  func.func @_fused_kernel(%arg0: i32, %arg1: i32, %arg2: memref<1x8x64xf32, #tpu.memory_space<vmem>>, %arg3: memref<1x64x128xbf16, #tpu.memory_space<vmem>>, %arg4: memref<1x128xf32, #tpu.memory_space<vmem>>, %arg5: memref<128x128xbf16, #tpu.memory_space<vmem>>, %arg6: memref<1x128xf32, #tpu.memory_space<vmem>>, %arg7: memref<1x128xf32, #tpu.memory_space<vmem>>, %arg8: memref<1x1xf32, #tpu.memory_space<vmem>>, %arg9: memref<8x1xf32, #tpu.memory_space<vmem>>, %arg10: memref<8x128xf32, #tpu.memory_space<vmem>>) attributes {dimension_semantics = [#tpu.dimension_semantics<parallel>, #tpu.dimension_semantics<arbitrary>], iteration_bounds = array<i64: 1, 3>, scalar_prefetch = 0 : i64, scratch_operands = 1 : i64, tpu.core_type = #tpu.core_type<tc>, window_params = [{transform_indices = @transform_0, window_bounds = array<i64: 1, 8, 64>}, {transform_indices = @transform_1, window_bounds = array<i64: 1, 64, 128>}, {pipeline_mode = #tpu.pipeline_mode<synchronous>, transform_indices = @transform_2, window_bounds = array<i64: 1, 128>}, {pipeline_mode = #tpu.pipeline_mode<synchronous>, transform_indices = @transform_3, window_bounds = array<i64: 128, 128>}, {pipeline_mode = #tpu.pipeline_mode<synchronous>, transform_indices = @transform_4, window_bounds = array<i64: 1, 128>}, {pipeline_mode = #tpu.pipeline_mode<synchronous>, transform_indices = @transform_5, window_bounds = array<i64: 1, 128>}, {pipeline_mode = #tpu.pipeline_mode<synchronous>, transform_indices = @transform_6, window_bounds = array<i64: 1, 1>}, {transform_indices = @transform_7, window_bounds = array<i64: 8, 1>}]} {
    %c0 = arith.constant 0 : index
    %c0_0 = arith.constant 0 : index
    %c0_1 = arith.constant 0 : index
    %0 = vector.load %arg2[%c0, %c0_0, %c0_1] : memref<1x8x64xf32, #tpu.memory_space<vmem>>, vector<1x8x64xf32>
    %1 = vector.shape_cast %0 : vector<1x8x64xf32> to vector<8x64xf32>
    %cst = arith.constant dense<0.000000e+00> : vector<8xf32>
    %2 = vector.multi_reduction <add>, %1, %cst [1] : vector<8x64xf32> to vector<8xf32>
    %3 = vector.shape_cast %2 : vector<8xf32> to vector<8x1xf32>
    %cst_2 = arith.constant 6.400000e+01 : f32
    %4 = vector.broadcast %cst_2 : f32 to vector<8x1xf32>
    %5 = arith.divf %3, %4 : vector<8x1xf32>
    %6 = vector.broadcast %5 : vector<8x1xf32> to vector<8x64xf32>
    %7 = arith.subf %1, %6 : vector<8x64xf32>
    %8 = arith.mulf %7, %7 : vector<8x64xf32>
    %cst_3 = arith.constant dense<0.000000e+00> : vector<8xf32>
    %9 = vector.multi_reduction <add>, %8, %cst_3 [1] : vector<8x64xf32> to vector<8xf32>
    %10 = vector.shape_cast %9 : vector<8xf32> to vector<8x1xf32>
    %cst_4 = arith.constant 6.400000e+01 : f32
    %11 = vector.broadcast %cst_4 : f32 to vector<8x1xf32>
    %12 = arith.divf %10, %11 : vector<8x1xf32>
    %cst_5 = arith.constant 9.99999974E-6 : f32
    %13 = vector.broadcast %cst_5 : f32 to vector<8x1xf32>
    %14 = arith.addf %12, %13 : vector<8x1xf32>
    %15 = math.rsqrt %14 : vector<8x1xf32>
    %16 = vector.broadcast %15 : vector<8x1xf32> to vector<8x64xf32>
    %17 = arith.mulf %7, %16 : vector<8x64xf32>
    %18 = arith.truncf %17 : vector<8x64xf32> to vector<8x64xbf16>
    %c0_6 = arith.constant 0 : index
    %c0_7 = arith.constant 0 : index
    %c0_8 = arith.constant 0 : index
    %19 = vector.load %arg3[%c0_6, %c0_7, %c0_8] : memref<1x64x128xbf16, #tpu.memory_space<vmem>>, vector<1x64x128xbf16>
    %20 = vector.shape_cast %19 : vector<1x64x128xbf16> to vector<64x128xbf16>
    %cst_9 = arith.constant dense<0.000000e+00> : vector<8x128xf32>
    %21 = tpu.matmul %18, %20, %cst_9 {dimension_numbers = #tpu.dot_dimension_numbers<[1], [0], [0], [1], [0, 0, 1, 1], [], []>} : vector<8x64xbf16>, vector<64x128xbf16>, vector<8x128xf32> -> vector<8x128xf32>
    %c0_i32 = arith.constant 0 : i32
    %22 = arith.cmpi eq, %arg1, %c0_i32 : i32
    %23 = arith.extui %22 : i1 to i32
    %c0_i32_10 = arith.constant 0 : i32
    %24 = arith.cmpi ne, %23, %c0_i32_10 : i32
    scf.if %24 {
      %c0_14 = arith.constant 0 : index
      %c0_15 = arith.constant 0 : index
      %31 = vector.load %arg10[%c0_14, %c0_15] : memref<8x128xf32, #tpu.memory_space<vmem>>, vector<8x128xf32>
      tpu.vector_store %arg10[%c0_14, %c0_15], %21 {strides = array<i32>} : memref<8x128xf32, #tpu.memory_space<vmem>>, vector<8x128xf32>,
    } else {
    }
    %c0_i32_11 = arith.constant 0 : i32
    %25 = arith.cmpi ne, %arg1, %c0_i32_11 : i32
    %26 = arith.extui %25 : i1 to i32
    %c0_i32_12 = arith.constant 0 : i32
    %27 = arith.cmpi ne, %26, %c0_i32_12 : i32
    scf.if %27 {
      %c0_14 = arith.constant 0 : index
      %c0_15 = arith.constant 0 : index
      %31 = vector.load %arg10[%c0_14, %c0_15] : memref<8x128xf32, #tpu.memory_space<vmem>>, vector<8x128xf32>
      %32 = arith.addf %31, %21 : vector<8x128xf32>
      %c0_16 = arith.constant 0 : index
      %c0_17 = arith.constant 0 : index
      %33 = vector.load %arg10[%c0_16, %c0_17] : memref<8x128xf32, #tpu.memory_space<vmem>>, vector<8x128xf32>
      tpu.vector_store %arg10[%c0_16, %c0_17], %32 {strides = array<i32>} : memref<8x128xf32, #tpu.memory_space<vmem>>, vector<8x128xf32>,
    } else {
    }
    %c2_i32 = arith.constant 2 : i32
    %28 = arith.cmpi eq, %arg1, %c2_i32 : i32
    %29 = arith.extui %28 : i1 to i32
    %c0_i32_13 = arith.constant 0 : i32
    %30 = arith.cmpi ne, %29, %c0_i32_13 : i32
    scf.if %30 {
      %c0_14 = arith.constant 0 : index
      %c0_15 = arith.constant 0 : index
      %31 = vector.load %arg10[%c0_14, %c0_15] : memref<8x128xf32, #tpu.memory_space<vmem>>, vector<8x128xf32>
      %c0_16 = arith.constant 0 : index
      %c0_17 = arith.constant 0 : index
      %32 = vector.load %arg4[%c0_16, %c0_17] : memref<1x128xf32, #tpu.memory_space<vmem>>, vector<1x128xf32>
      %33 = vector.broadcast %32 : vector<1x128xf32> to vector<8x128xf32>
      %34 = arith.addf %31, %33 : vector<8x128xf32>
      %cst_18 = arith.constant 0.000000e+00 : f32
      %35 = vector.broadcast %cst_18 : f32 to vector<8x128xf32>
      %36 = arith.maximumf %34, %35 : vector<8x128xf32>
      %37 = arith.truncf %36 : vector<8x128xf32> to vector<8x128xbf16>
      %c0_19 = arith.constant 0 : index
      %c0_20 = arith.constant 0 : index
      %38 = vector.load %arg5[%c0_19, %c0_20] : memref<128x128xbf16, #tpu.memory_space<vmem>>, vector<128x128xbf16>
      %cst_21 = arith.constant dense<0.000000e+00> : vector<8x128xf32>
      %39 = tpu.matmul %37, %38, %cst_21 {dimension_numbers = #tpu.dot_dimension_numbers<[1], [0], [0], [1], [0, 0, 1, 1], [], []>} : vector<8x128xbf16>, vector<128x128xbf16>, vector<8x128xf32> -> vector<8x128xf32>
      %c0_22 = arith.constant 0 : index
      %c0_23 = arith.constant 0 : index
      %40 = vector.load %arg6[%c0_22, %c0_23] : memref<1x128xf32, #tpu.memory_space<vmem>>, vector<1x128xf32>
      %41 = vector.broadcast %40 : vector<1x128xf32> to vector<8x128xf32>
      %42 = arith.addf %39, %41 : vector<8x128xf32>
      %cst_24 = arith.constant 0.000000e+00 : f32
      %43 = vector.broadcast %cst_24 : f32 to vector<8x128xf32>
      %44 = arith.maximumf %42, %43 : vector<8x128xf32>
      %c0_25 = arith.constant 0 : index
      %c0_26 = arith.constant 0 : index
      %45 = vector.load %arg7[%c0_25, %c0_26] : memref<1x128xf32, #tpu.memory_space<vmem>>, vector<1x128xf32>
      %46 = vector.broadcast %45 : vector<1x128xf32> to vector<8x128xf32>
      %47 = arith.mulf %44, %46 : vector<8x128xf32>
      %cst_27 = arith.constant dense<0.000000e+00> : vector<8xf32>
      %48 = vector.multi_reduction <add>, %47, %cst_27 [1] : vector<8x128xf32> to vector<8xf32>
      %49 = vector.shape_cast %48 : vector<8xf32> to vector<8x1xf32>
      %c0_28 = arith.constant 0 : index
      %c0_29 = arith.constant 0 : index
      %50 = vector.load %arg8[%c0_28, %c0_29] : memref<1x1xf32, #tpu.memory_space<vmem>>, vector<1x1xf32>
      %51 = vector.broadcast %50 : vector<1x1xf32> to vector<8x1xf32>
      %52 = arith.addf %49, %51 : vector<8x1xf32>
      %c0_30 = arith.constant 0 : index
      %c0_31 = arith.constant 0 : index
      %53 = vector.load %arg9[%c0_30, %c0_31] : memref<8x1xf32, #tpu.memory_space<vmem>>, vector<8x1xf32>
      tpu.vector_store %arg9[%c0_30, %c0_31], %52 {strides = array<i32>} : memref<8x1xf32, #tpu.memory_space<vmem>>, vector<8x1xf32>,
    } else {
    }
    return
  }
  func.func @transform_0(%arg0: i32, %arg1: i32) -> (i32, i32, i32) {
    %c0_i32 = arith.constant 0 : i32
    %c0_i32_0 = arith.constant 0 : i32
    return %arg1, %arg0, %c0_i32 : i32, i32, i32
  }
  func.func @transform_1(%arg0: i32, %arg1: i32) -> (i32, i32, i32) {
    %c0_i32 = arith.constant 0 : i32
    %c0_i32_0 = arith.constant 0 : i32
    %c0_i32_1 = arith.constant 0 : i32
    return %arg1, %c0_i32, %c0_i32_0 : i32, i32, i32
  }
  func.func @transform_2(%arg0: i32, %arg1: i32) -> (i32, i32) {
    %c0_i32 = arith.constant 0 : i32
    %c0_i32_0 = arith.constant 0 : i32
    %c0_i32_1 = arith.constant 0 : i32
    return %c0_i32, %c0_i32_0 : i32, i32
  }
  func.func @transform_3(%arg0: i32, %arg1: i32) -> (i32, i32) {
    %c0_i32 = arith.constant 0 : i32
    %c0_i32_0 = arith.constant 0 : i32
    %c0_i32_1 = arith.constant 0 : i32
    return %c0_i32, %c0_i32_0 : i32, i32
  }
  func.func @transform_4(%arg0: i32, %arg1: i32) -> (i32, i32) {
    %c0_i32 = arith.constant 0 : i32
    %c0_i32_0 = arith.constant 0 : i32
    %c0_i32_1 = arith.constant 0 : i32
    return %c0_i32, %c0_i32_0 : i32, i32
  }
  func.func @transform_5(%arg0: i32, %arg1: i32) -> (i32, i32) {
    %c0_i32 = arith.constant 0 : i32
    %c0_i32_0 = arith.constant 0 : i32
    %c0_i32_1 = arith.constant 0 : i32
    return %c0_i32, %c0_i32_0 : i32, i32
  }
  func.func @transform_6(%arg0: i32, %arg1: i32) -> (i32, i32) {
    %c0_i32 = arith.constant 0 : i32
    %c0_i32_0 = arith.constant 0 : i32
    %c0_i32_1 = arith.constant 0 : i32
    return %c0_i32, %c0_i32_0 : i32, i32
  }
  func.func @transform_7(%arg0: i32, %arg1: i32) -> (i32, i32) {
    %c0_i32 = arith.constant 0 : i32
    %c0_i32_0 = arith.constant 0 : i32
    return %arg0, %c0_i32 : i32, i32
  }
}

</mosaic_0001>

<llo_original>
// kernel: model_forward.1
$region0: #{model_forward.1}
  #allocation0 [shape = 'u32[]', space=smem, size = 0x4, offset = 0x4, fixed_abs, tag = 'smem constant byte address 0x4 - core index']
  #allocation1 [shape = 'u32[72,128]{1,0:T(1,128)}', space=vmem, size = 0x9000, scoped, tag = 'internal scratch']
  #allocation2 [shape = 'f32[8,128]{1,0:T(8,128)}', space=vmem, size = 0x1000, scoped, tag = 'scratch operand']
  #allocation3 [shape = 'f32[1,1]{1,0:T(1,128)S(1)}', space=vmem, size = 0x200, scoped, tag = 'scoped memory for model_forward.1']
  %s0 = inlined_call_operand.vmem [shape: f32[3,8,64], index: 0, kind: input, shape index: {}]
  %s1 = inlined_call_operand.vmem [shape: bf16[3,64,128], index: 1, kind: input, shape index: {}]
  %s2 = inlined_call_operand.vmem [shape: f32[1,128], index: 2, kind: input, shape index: {}]
  %s3 = inlined_call_operand.hbm [shape: bf16[128,128], index: 3, kind: input, shape index: {}]
  %s4 = inlined_call_operand.vmem [shape: f32[1,128], index: 4, kind: input, shape index: {}]
  %s5 = inlined_call_operand.vmem [shape: f32[1,128], index: 5, kind: input, shape index: {}]
  %s6 = inlined_call_operand.<no memory space> [shape: f32[1,1], index: 6, kind: input, shape index: {}]
  %s7 = inlined_call_operand.vmem [shape: f32[8,1], index: 7, kind: output, shape index: {}]
  %s8 = sld [smem:[#allocation0]]
  $region77: #{model_forward.1} parent=0
    _
  %s10 = ssub.s32 1, %s8
  %s11 = scalar_select 0, %s10, %s8
  %v12 = vstv %s6
  %13 = vst [vmem:[#allocation3] sm:$0x1] %v12
  $region1: #{model_forward.1} parent=0
    #allocation4 [shape = 'u8[32768]{0}', space=vmem, size = 0x8000, scoped, tag = 'input window, operand 3, single buffered']
    #allocation5 [shape = 's32[2]{0}', space=sflag, size = 0x8, scoped, tag = 'scoped memory for model_forward.1']
    %14 = vsyncpa [#allocation5], 0
    loop: start=0, step=1, limit=5
    $region2: #{model_forward.1} parent=1 // loop_pre_header
      _
    $region3: #{model_forward.1} parent=1 // loop_header
      %s16 = sphi 0, %s20
      %p17 = scmp.ge.s32.totalorder %s16, 5
      %s23 = sphi 0, %s35
      %s24 = sphi 0, %s31
      %s25 = sphi 0, %s23
      %s26 = sphi 0, %s24
      %s27 = sphi 0, %s25
      %s28 = sphi 0, %s26
      %s40 = sphi 0, %s42
      %s43 = sphi 0, %s40
      %s44 = sphi 0, %s43
      %s60 = sphi 0, %s44
      %s66 = sphi 0, %s68
      %s69 = sphi 0, %s66
      %s70 = sphi 0, %s69
      %s86 = sphi 0, %s70
      %s90 = sphi 0, %s90
      %s92 = sphi 0, %s90
      %s93 = sphi 0, %s92
      %s107 = sphi 0, %s93
      %s111 = sphi 0, %s111
      %s113 = sphi 0, %s111
      %s114 = sphi 0, %s113
      %s128 = sphi 0, %s114
      %s132 = sphi 0, %s132
      %s134 = sphi 0, %s132
      %s135 = sphi 0, %s134
      %s149 = sphi 0, %s135
      %s153 = sphi 0, %s153
      %s155 = sphi 0, %s153
      %s156 = sphi 0, %s155
      %s170 = sphi 0, %s156
      %s174 = sphi 0, %s174
      %s176 = sphi 0, %s174
      %s177 = sphi 0, %s176
      %s191 = sphi 0, %s177
      %s197 = sphi 0, %s199
      %s200 = sphi 0, %s197
      %s201 = sphi 0, %s200
      %s217 = sphi 0, %s201
    $region4: #{model_forward.1} parent=1 // loop_header_branch
      %19 = sbr.rel (%p17) target = $region8
    $region5: #{model_forward.1} parent=1 // loop_body
      %s21 = ssub.s32 %s16, 1
      %s22 = ssub.s32 %s16, 2
      %s29 = sadd.s32 1, %s24
      %p30 = scmp.ge.s32.totalorder %s29, 3
      %s31 = scalar_select %p30, 0, %s29
      %s32 = sadd.s32 1, %s23
      %s33 = scalar_select %p30, %s32, %s23
      %p34 = scmp.ge.s32.totalorder %s33, 1
      %s35 = scalar_select %p34, 0, %s33
      %s36 = ssub.s32 %s24, %s31
      %s37 = ssub.s32 %s23, %s35
      %s38 = sor.u32 %s36, %s37
      %p39 = scmp.eq.s32.totalorder %s38, 0
      %s41 = sadd.s32 %s40, 1
      %s42 = scalar_select %p39, %s40, %s41
      %p45 = pneg %p39
      %p46 = scmp.eq.s32.totalorder %s16, 2
      %p47 = por %p45, %p46
      %p48 = scmp.ne.s32.totalorder %s40, %s43
      %p49 = scmp.eq.s32.totalorder %s16, 0
      %p50 = por %p48, %p49
      %p51 = scmp.ne.s32.totalorder %s40, %s43
      %p52 = scmp.eq.s32.totalorder %s21, 2
      %p53 = por %p51, %p52
      %p54 = scmp.ne.s32.totalorder %s43, %s44
      %p55 = scmp.eq.s32.totalorder %s21, 0
      %p56 = por %p54, %p55
      %p57 = scmp.ne.s32.totalorder %s43, %s44
      %p58 = scmp.eq.s32.totalorder %s22, 2
      %p59 = por %p57, %p58
      %p61 = scmp.ne.s32.totalorder %s44, %s60
      %p62 = scmp.eq.s32.totalorder %s22, 0
      %p63 = por %p61, %p62
      %s64 = ssub.s32 %s24, %s31
      %p65 = scmp.eq.s32.totalorder %s64, 0
      %s67 = sadd.s32 %s66, 1
      %s68 = scalar_select %p65, %s66, %s67
      %p71 = pneg %p65
      %p72 = scmp.eq.s32.totalorder %s16, 2
      %p73 = por %p71, %p72
      %p74 = scmp.ne.s32.totalorder %s66, %s69
      %p75 = scmp.eq.s32.totalorder %s16, 0
      %p76 = por %p74, %p75
      %p77 = scmp.ne.s32.totalorder %s66, %s69
      %p78 = scmp.eq.s32.totalorder %s21, 2
      %p79 = por %p77, %p78
      %p80 = scmp.ne.s32.totalorder %s69, %s70
      %p81 = scmp.eq.s32.totalorder %s21, 0
      %p82 = por %p80, %p81
      %p83 = scmp.ne.s32.totalorder %s69, %s70
      %p84 = scmp.eq.s32.totalorder %s22, 2
      %p85 = por %p83, %p84
      %p87 = scmp.ne.s32.totalorder %s70, %s86
      %p88 = scmp.eq.s32.totalorder %s22, 0
      %p89 = por %p87, %p88
      %s91 = sadd.s32 %s90, 1
      %p94 = scmp.eq.s32.totalorder %s16, 2
      %p95 = scmp.ne.s32.totalorder %s90, %s92
      %p96 = scmp.eq.s32.totalorder %s16, 0
      %p97 = por %p95, %p96
      %p98 = scmp.ne.s32.totalorder %s90, %s92
      %p99 = scmp.eq.s32.totalorder %s21, 2
      %p100 = por %p98, %p99
      %p101 = scmp.ne.s32.totalorder %s92, %s93
      %p102 = scmp.eq.s32.totalorder %s21, 0
      %p103 = por %p101, %p102
      %p104 = scmp.ne.s32.totalorder %s92, %s93
      %p105 = scmp.eq.s32.totalorder %s22, 2
      %p106 = por %p104, %p105
      %p108 = scmp.ne.s32.totalorder %s93, %s107
      %p109 = scmp.eq.s32.totalorder %s22, 0
      %p110 = por %p108, %p109
      %s112 = sadd.s32 %s111, 1
      %p115 = scmp.eq.s32.totalorder %s16, 2
      %p116 = scmp.ne.s32.totalorder %s111, %s113
      %p117 = scmp.eq.s32.totalorder %s16, 0
      %p118 = por %p116, %p117
      %p119 = scmp.ne.s32.totalorder %s111, %s113
      %p120 = scmp.eq.s32.totalorder %s21, 2
      %p121 = por %p119, %p120
      %p122 = scmp.ne.s32.totalorder %s113, %s114
      %p123 = scmp.eq.s32.totalorder %s21, 0
      %p124 = por %p122, %p123
      %p125 = scmp.ne.s32.totalorder %s113, %s114
      %p126 = scmp.eq.s32.totalorder %s22, 2
      %p127 = por %p125, %p126
      %p129 = scmp.ne.s32.totalorder %s114, %s128
      %p130 = scmp.eq.s32.totalorder %s22, 0
      %p131 = por %p129, %p130
      %s133 = sadd.s32 %s132, 1
      %p136 = scmp.eq.s32.totalorder %s16, 2
      %p137 = scmp.ne.s32.totalorder %s132, %s134
      %p138 = scmp.eq.s32.totalorder %s16, 0
      %p139 = por %p137, %p138
      %p140 = scmp.ne.s32.totalorder %s132, %s134
      %p141 = scmp.eq.s32.totalorder %s21, 2
      %p142 = por %p140, %p141
      %p143 = scmp.ne.s32.totalorder %s134, %s135
      %p144 = scmp.eq.s32.totalorder %s21, 0
      %p145 = por %p143, %p144
      %p146 = scmp.ne.s32.totalorder %s134, %s135
      %p147 = scmp.eq.s32.totalorder %s22, 2
      %p148 = por %p146, %p147
      %p150 = scmp.ne.s32.totalorder %s135, %s149
      %p151 = scmp.eq.s32.totalorder %s22, 0
      %p152 = por %p150, %p151
      %s154 = sadd.s32 %s153, 1
      %p157 = scmp.eq.s32.totalorder %s16, 2
      %p158 = scmp.ne.s32.totalorder %s153, %s155
      %p159 = scmp.eq.s32.totalorder %s16, 0
      %p160 = por %p158, %p159
      %p161 = scmp.ne.s32.totalorder %s153, %s155
      %p162 = scmp.eq.s32.totalorder %s21, 2
      %p163 = por %p161, %p162
      %p164 = scmp.ne.s32.totalorder %s155, %s156
      %p165 = scmp.eq.s32.totalorder %s21, 0
      %p166 = por %p164, %p165
      %p167 = scmp.ne.s32.totalorder %s155, %s156
      %p168 = scmp.eq.s32.totalorder %s22, 2
      %p169 = por %p167, %p168
      %p171 = scmp.ne.s32.totalorder %s156, %s170
      %p172 = scmp.eq.s32.totalorder %s22, 0
      %p173 = por %p171, %p172
      %s175 = sadd.s32 %s174, 1
      %p178 = scmp.eq.s32.totalorder %s16, 2
      %p179 = scmp.ne.s32.totalorder %s174, %s176
      %p180 = scmp.eq.s32.totalorder %s16, 0
      %p181 = por %p179, %p180
      %p182 = scmp.ne.s32.totalorder %s174, %s176
      %p183 = scmp.eq.s32.totalorder %s21, 2
      %p184 = por %p182, %p183
      %p185 = scmp.ne.s32.totalorder %s176, %s177
      %p186 = scmp.eq.s32.totalorder %s21, 0
      %p187 = por %p185, %p186
      %p188 = scmp.ne.s32.totalorder %s176, %s177
      %p189 = scmp.eq.s32.totalorder %s22, 2
      %p190 = por %p188, %p189
      %p192 = scmp.ne.s32.totalorder %s177, %s191
      %p193 = scmp.eq.s32.totalorder %s22, 0
      %p194 = por %p192, %p193
      %s195 = ssub.s32 %s23, %s35
      %p196 = scmp.eq.s32.totalorder %s195, 0
      %s198 = sadd.s32 %s197, 1
      %s199 = scalar_select %p196, %s197, %s198
      %p202 = pneg %p196
      %p203 = scmp.eq.s32.totalorder %s16, 2
      %p204 = por %p202, %p203
      %p205 = scmp.ne.s32.totalorder %s197, %s200
      %p206 = scmp.eq.s32.totalorder %s16, 0
      %p207 = por %p205, %p206
      %p208 = scmp.ne.s32.totalorder %s197, %s200
      %p209 = scmp.eq.s32.totalorder %s21, 2
      %p210 = por %p208, %p209
      %p211 = scmp.ne.s32.totalorder %s200, %s201
      %p212 = scmp.eq.s32.totalorder %s21, 0
      %p213 = por %p211, %p212
      %p214 = scmp.ne.s32.totalorder %s200, %s201
      %p215 = scmp.eq.s32.totalorder %s22, 2
      %p216 = por %p214, %p215
      %p218 = scmp.ne.s32.totalorder %s201, %s217
      %p219 = scmp.eq.s32.totalorder %s22, 0
      %p220 = por %p218, %p219
      %p221 = scmp.le.s32.totalorder 1, %s16
      %p222 = scmp.lt.s32.totalorder %s16, 4
      %p223 = pnand %p221, %p222
      %p224 = pneg %p223
      // Predicated region
      $region9: #{model_forward.1} parent=5 // pred_check
        _
      $region10: #{model_forward.1} parent=5 // pred_check_branch
        %226 = sbr.rel (%p223) target = $region12
      $region11: #{model_forward.1} parent=5 // pred_region
        %s227 = ssub.s32 %s16, 1
        // Predicated region
        $region13: #{model_forward.1} parent=11 // pred_check
          %p228 = pneg %p103
        $region14: #{model_forward.1} parent=11 // pred_check_branch
          %230 = sbr.rel (%p228) target = $region16
        $region15: #{model_forward.1} parent=11 // pred_region
          _
        $region16: #{model_forward.1} parent=11 // pred_fallthru
          _
        // Predicated region
        $region17: #{model_forward.1} parent=11 // pred_check
          %p231 = pneg %p124
        $region18: #{model_forward.1} parent=11 // pred_check_branch
          %233 = sbr.rel (%p231) target = $region20
        $region19: #{model_forward.1} parent=11 // pred_region
          %235 = vsyncadd [#allocation5], 0
          %s236 = sshll.u32 %s3, 4
          %s237 = int_to_ptr.hbm [resolvable:$true] %s236
          %s238 = sshll.u32 [#allocation4], 4
          %s239 = int_to_ptr.vmem [resolvable:$true] %s238
          %244 = dma.hbm_to_vmem [thread:$0]  %s237, 1024, %s239, [#allocation5], 64, 64, 4
        $region20: #{model_forward.1} parent=11 // pred_fallthru
          _
        // Predicated region
        $region21: #{model_forward.1} parent=11 // pred_check
          %p245 = pneg %p145
        $region22: #{model_forward.1} parent=11 // pred_check_branch
          %247 = sbr.rel (%p245) target = $region24
        $region23: #{model_forward.1} parent=11 // pred_region
          _
        $region24: #{model_forward.1} parent=11 // pred_fallthru
          _
        // Predicated region
        $region25: #{model_forward.1} parent=11 // pred_check
          %p248 = pneg %p166
        $region26: #{model_forward.1} parent=11 // pred_check_branch
          %250 = sbr.rel (%p248) target = $region28
        $region27: #{model_forward.1} parent=11 // pred_region
          _
        $region28: #{model_forward.1} parent=11 // pred_fallthru
          _
        // Predicated region
        $region29: #{model_forward.1} parent=11 // pred_check
          %p251 = pneg %p187
        $region30: #{model_forward.1} parent=11 // pred_check_branch
          %253 = sbr.rel (%p251) target = $region32
        $region31: #{model_forward.1} parent=11 // pred_region
          _
        $region32: #{model_forward.1} parent=11 // pred_fallthru
          _
      $region12: #{model_forward.1} parent=5 // pred_fallthru
        _
      %p254 = scmp.lt.s32.totalorder %s16, 3
      // Predicated region
      $region33: #{model_forward.1} parent=5 // pred_check
        %p255 = pneg %p254
      $region34: #{model_forward.1} parent=5 // pred_check_branch
        %257 = sbr.rel (%p255) target = $region36
      $region35: #{model_forward.1} parent=5 // pred_region
        // Predicated region
        $region37: #{model_forward.1} parent=35 // pred_check
          %p258 = pneg %p50
        $region38: #{model_forward.1} parent=35 // pred_check_branch
          %260 = sbr.rel (%p258) target = $region40
        $region39: #{model_forward.1} parent=35 // pred_region
          %p261 = scmp.lt.s32.totalorder %s24, 2
          %s262 = scalar_select %p261, %s24, 2
          %p263 = scmp.lt.s32.totalorder %s23, 0
          %s264 = scalar_select %p263, %s23, 0
          %s265 = sadd.s32 %s264, %s262
          %s266 = smul.addr %s265, 8
          %s267 = scalar_lea.vmem %s0, %s266
        $region40: #{model_forward.1} parent=35 // pred_fallthru
          _
        // Predicated region
        $region41: #{model_forward.1} parent=35 // pred_check
          %p268 = pneg %p76
        $region42: #{model_forward.1} parent=35 // pred_check_branch
          %270 = sbr.rel (%p268) target = $region44
        $region43: #{model_forward.1} parent=35 // pred_region
          %p271 = scmp.lt.s32.totalorder %s24, 2
          %s272 = scalar_select %p271, %s24, 2
          %s273 = smul.addr %s272, 8
          %s274 = smul.addr %s273, 4
          %s275 = scalar_lea.vmem %s1, %s274
        $region44: #{model_forward.1} parent=35 // pred_fallthru
          _
      $region36: #{model_forward.1} parent=5 // pred_fallthru
        _
      %p276 = scmp.le.s32.totalorder 1, %s16
      %p277 = scmp.lt.s32.totalorder %s16, 4
      %p278 = pnand %p276, %p277
      %p279 = pneg %p278
      // Predicated region
      $region45: #{model_forward.1} parent=5 // pred_check
        _
      $region46: #{model_forward.1} parent=5 // pred_check_branch
        %281 = sbr.rel (%p278) target = $region48
      $region47: #{model_forward.1} parent=5 // pred_region
        %s282 = ssub.s32 %s16, 1
        // Predicated region
        $region49: #{model_forward.1} parent=47 // pred_check
          %p283 = pneg %p124
        $region50: #{model_forward.1} parent=47 // pred_check_branch
          %285 = sbr.rel (%p283) target = $region52
        $region51: #{model_forward.1} parent=47 // pred_region
          %287 = dma.done [#allocation5], 1024
        $region52: #{model_forward.1} parent=47 // pred_fallthru
          _
        %p288 = scmp.lt.s32.totalorder %s26, 2
        %s289 = scalar_select %p288, %s26, 2
        %p290 = scmp.lt.s32.totalorder %s25, 0
        %s291 = scalar_select %p290, %s25, 0
        %s292 = sadd.s32 %s291, %s289
        %s293 = smul.addr %s292, 8
        %s294 = scalar_lea.vmem %s0, %s293
        %p295 = pneg %p56
        %p296 = pneg %p53
        %p297 = scmp.lt.s32.totalorder %s26, 2
        %s298 = scalar_select %p297, %s26, 2
        %s299 = smul.addr %s298, 8
        %s300 = smul.addr %s299, 4
        %s301 = scalar_lea.vmem %s1, %s300
        %p302 = pneg %p82
        %p303 = pneg %p79
        %p304 = pneg %p103
        %p305 = pneg %p100
        %p306 = pneg %p124
        %p307 = pneg %p121
        %p308 = pneg %p145
        %p309 = pneg %p142
        %p310 = pneg %p166
        %p311 = pneg %p163
        %p312 = pneg %p187
        %p313 = pneg %p184
        %p314 = pneg %p213
        %p315 = pneg %p210
        %p316 = scmp.lt.s32.totalorder %s25, 0
        %s317 = scalar_select %p316, %s25, 0
        %s318 = smul.addr %s317, 8
        %s319 = scalar_lea.vmem %s7, %s318
        %p320 = scmp.lt.s32.totalorder %s26, 2
        %s321 = scalar_select %p320, %s26, 2
        %p322 = scmp.lt.s32.totalorder %s25, 0
        %s323 = scalar_select %p322, %s25, 0
        %s324 = sadd.s32 %s323, %s321
        %s325 = smul.addr %s324, 8
        %s326 = scalar_lea.vmem %s0, %s325
        %p327 = scmp.lt.s32.totalorder %s26, 2
        %s328 = scalar_select %p327, %s26, 2
        %s329 = smul.addr %s328, 8
        %s330 = smul.addr %s329, 4
        %s331 = scalar_lea.vmem %s1, %s330
        %p332 = scmp.lt.s32.totalorder %s25, 0
        %s333 = scalar_select %p332, %s25, 0
        %s334 = smul.addr %s333, 8
        %s335 = scalar_lea.vmem %s7, %s334
        %v337 = vld [vmem:[%s326] sm:$0xff]
        %vm338 = vcmask 523264
        %v339 = vsel %vm338, %v337, 0.0
        %340 = vadd.xlane.f32.xlu0 %v339
        %v341 = vpop.xlane.xlu0 %340
        %v342 = vrcp.pop 64.0
        %v343 = vmul.f32 64.0, %v342
        %v344 = vsub.f32 1.0, %v343
        %v345 = vmul.f32 %v342, %v344
        %v346 = vadd.f32 %v342, %v345
        %vm347 = vweird.f32 %v342
        %v348 = vsel %vm347, %v342, %v346
        %v349 = vmul.f32 %v341, %v348
        %v350 = vsub.f32 %v337, %v349
        %v351 = vmul.f32 %v350, %v350
        %v352 = vsel %vm338, %v351, 0.0
        %353 = vadd.xlane.f32.xlu0 %v352
        %v354 = vpop.xlane.xlu0 %353
        %v355 = vmul.f32 %v354, %v348
        %v356 = vadd.f32 %v355, 1e-05
        %v357 = vrsqrt.pop %v356
        %v358 = vmul.f32 %v357, %v356
        %v359 = vmul.f32 %v358, %v357
        %v360 = vmul.f32 0.5, %v359
        %v361 = vsub.f32 1.5, %v360
        %v362 = vmul.f32 %v357, %v361
        %vm363 = vweird.f32 %v356
        %vm364 = vweird.f32 %v357
        %vm365 = vmor %vm363, %vm364
        %v366 = vsel %vm365, %v357, %v362
        %v367 = vmul.f32 %v350, %v366
        %v368 = vpack.c.bf16 %v367, %v367
        %v369 = vld [vmem:[%s331] sm:$0xf]
        %v370 = vld [vmem:[%s331 + $0x4] sm:$0xf]
        %v371 = vld [vmem:[%s331 + $0x8] sm:$0xf]
        %v372 = vld [vmem:[%s331 + $0xc] sm:$0xf]
        %v373 = vld [vmem:[%s331 + $0x10] sm:$0xf]
        %v374 = vld [vmem:[%s331 + $0x14] sm:$0xf]
        %v375 = vld [vmem:[%s331 + $0x18] sm:$0xf]
        %v376 = vld [vmem:[%s331 + $0x1c] sm:$0xf]
        %v385 = vunpack.c.l.b16 %v369
        %v386 = vunpack.c.l.b16 %v370
        %v387 = vunpack.c.l.b16 %v371
        %v388 = vunpack.c.l.b16 %v372
        %v389 = vunpack.c.l.b16 %v373
        %v390 = vunpack.c.l.b16 %v374
        %v391 = vunpack.c.l.b16 %v375
        %v392 = vunpack.c.l.b16 %v376
        %v393 = vpack.c.b16 %v386, %v385
        %v394 = vpack.c.b16 %v388, %v387
        %v395 = vpack.c.b16 %v390, %v389
        %v396 = vpack.c.b16 %v392, %v391
        %v402 = vsel %vm338, %v368, 0
        %404 = vmatpush.bf16.msra.mxu0 0
        %405 = vmatpush.bf16.msra.mxu0 0
        %406 = vmatpush.bf16.msra.mxu0 0
        %407 = vmatpush.bf16.msra.mxu0 0
        %408 = vmatpush.bf16.msra.mxu0 %v396
        %409 = vmatpush.bf16.msra.mxu0 %v395
        %410 = vmatpush.bf16.msra.mxu0 %v394
        %411 = vmatpush.bf16.msra.mxu0 %v393
        %412 = vmatmul.bf16.gmra.mxu0 %v402
        %v413 = vpop.f32.mrf.mxu0
        %v414 = vadd.f32 0.0, %v413
        %v415 = vpop.f32.mrf.mxu0
        %416 = vdwg.mxu0
        %p417 = scmp.eq.s32.totalorder %s26, 0
        // Predicated region
        $region53: #{model_forward.1} parent=47 // pred_check
          %p418 = pneg %p417
        $region54: #{model_forward.1} parent=47 // pred_check_branch
          %420 = sbr.rel (%p418) target = $region56
        $region55: #{model_forward.1} parent=47 // pred_region
          %421 = vst [vmem:[#allocation2] sm:$0xff] %v414
        $region56: #{model_forward.1} parent=47 // pred_fallthru
          _
        %p422 = scmp.ne.s32.totalorder %s26, 0
        // Predicated region
        $region57: #{model_forward.1} parent=47 // pred_check
          %p423 = pneg %p422
        $region58: #{model_forward.1} parent=47 // pred_check_branch
          %425 = sbr.rel (%p423) target = $region60
        $region59: #{model_forward.1} parent=47 // pred_region
          %v426 = vld [vmem:[#allocation2] sm:$0xff]
          %v427 = vadd.f32 %v426, %v414
          %428 = vst [vmem:[#allocation2] sm:$0xff] %v427
        $region60: #{model_forward.1} parent=47 // pred_fallthru
          _
        %p429 = scmp.eq.s32.totalorder %s26, 2
        // Predicated region
        $region61: #{model_forward.1} parent=47 // pred_check
          %p430 = pneg %p429
        $region62: #{model_forward.1} parent=47 // pred_check_branch
          %432 = sbr.rel (%p430) target = $region64
        $region63: #{model_forward.1} parent=47 // pred_region
          %v433 = vld [vmem:[#allocation2] sm:$0xff]
          %v434 = vld [vmem:[%s2] sm:$0x1]
          %v436 = vperm.slane %v434, 0
          %v438 = vadd.f32 %v433, %v436
          %v439 = vmax.f32 %v438, 0.0
          %v440 = vpack.c.bf16 %v439, %v439
          %v441 = vld [vmem:[#allocation4] sm:$0xf]
          %v442 = vld [vmem:[#allocation4 + $0x4] sm:$0xf]
          %v443 = vld [vmem:[#allocation4 + $0x8] sm:$0xf]
          %v444 = vld [vmem:[#allocation4 + $0xc] sm:$0xf]
          %v445 = vld [vmem:[#allocation4 + $0x10] sm:$0xf]
          %v446 = vld [vmem:[#allocation4 + $0x14] sm:$0xf]
          %v447 = vld [vmem:[#allocation4 + $0x18] sm:$0xf]
          %v448 = vld [vmem:[#allocation4 + $0x1c] sm:$0xf]
          %v449 = vld [vmem:[#allocation4 + $0x20] sm:$0xf]
          %v450 = vld [vmem:[#allocation4 + $0x24] sm:$0xf]
          %v451 = vld [vmem:[#allocation4 + $0x28] sm:$0xf]
          %v452 = vld [vmem:[#allocation4 + $0x2c] sm:$0xf]
          %v453 = vld [vmem:[#allocation4 + $0x30] sm:$0xf]
          %v454 = vld [vmem:[#allocation4 + $0x34] sm:$0xf]
          %v455 = vld [vmem:[#allocation4 + $0x38] sm:$0xf]
          %v456 = vld [vmem:[#allocation4 + $0x3c] sm:$0xf]
          %v457 = vld [vmem:[%s4] sm:$0x1]
          %v459 = vperm.slane %v457, 0
          %v477 = vunpack.c.l.b16 %v441
          %v478 = vunpack.c.l.b16 %v442
          %v479 = vunpack.c.l.b16 %v443
          %v480 = vunpack.c.l.b16 %v444
          %v481 = vunpack.c.l.b16 %v445
          %v482 = vunpack.c.l.b16 %v446
          %v483 = vunpack.c.l.b16 %v447
          %v484 = vunpack.c.l.b16 %v448
          %v485 = vunpack.c.l.b16 %v449
          %v486 = vunpack.c.l.b16 %v450
          %v487 = vunpack.c.l.b16 %v451
          %v488 = vunpack.c.l.b16 %v452
          %v489 = vunpack.c.l.b16 %v453
          %v490 = vunpack.c.l.b16 %v454
          %v491 = vunpack.c.l.b16 %v455
          %v492 = vunpack.c.l.b16 %v456
          %v493 = vpack.c.b16 %v478, %v477
          %v494 = vpack.c.b16 %v480, %v479
          %v495 = vpack.c.b16 %v482, %v481
          %v496 = vpack.c.b16 %v484, %v483
          %v497 = vpack.c.b16 %v486, %v485
          %v498 = vpack.c.b16 %v488, %v487
          %v499 = vpack.c.b16 %v490, %v489
          %v500 = vpack.c.b16 %v492, %v491
          %509 = vmatpush.bf16.msra.mxu0 %v500
          %510 = vmatpush.bf16.msra.mxu0 %v499
          %511 = vmatpush.bf16.msra.mxu0 %v498
          %512 = vmatpush.bf16.msra.mxu0 %v497
          %513 = vmatpush.bf16.msra.mxu0 %v496
          %514 = vmatpush.bf16.msra.mxu0 %v495
          %515 = vmatpush.bf16.msra.mxu0 %v494
          %516 = vmatpush.bf16.msra.mxu0 %v493
          %517 = vmatmul.bf16.gmra.mxu0 %v440
          %v518 = vpop.f32.mrf.mxu0
          %v519 = vadd.f32 %v459, %v518
          %v520 = vpop.f32.mrf.mxu0
          %521 = vdwg.mxu0
          %v522 = vmax.f32 %v519, 0.0
          %v523 = vld [vmem:[%s5] sm:$0x1]
          %v525 = vperm.slane %v523, 0
          %v527 = vmul.f32 %v522, %v525
          %528 = vadd.xlane.f32.xlu0 %v527
          %v529 = vpop.xlane.xlu0 %528
          %v530 = vld [vmem:[#allocation3] sm:$0x1]
          %v532 = vperm.slane %v530, 0
          %v534 = vadd.f32 %v529, %v532
          %vm535 = vcmask 7168
          %536 = vst.msk [vmem:[%s335] sm:$0xff] %vm535, %v534
        $region64: #{model_forward.1} parent=47 // pred_fallthru
          _
        %p537 = scmp.lt.s32.totalorder %s25, 0
        %s538 = scalar_select %p537, %s25, 0
        %s539 = smul.addr %s538, 8
        %s540 = scalar_lea.vmem %s7, %s539
        // Predicated region
        $region65: #{model_forward.1} parent=47 // pred_check
          %p541 = pneg %p210
        $region66: #{model_forward.1} parent=47 // pred_check_branch
          %543 = sbr.rel (%p541) target = $region68
        $region67: #{model_forward.1} parent=47 // pred_region
          _
        $region68: #{model_forward.1} parent=47 // pred_fallthru
          _
        // Predicated region
        $region69: #{model_forward.1} parent=47 // pred_check
          %p544 = pneg %p210
        $region70: #{model_forward.1} parent=47 // pred_check_branch
          %546 = sbr.rel (%p544) target = $region72
        $region71: #{model_forward.1} parent=47 // pred_region
          %p547 = scmp.lt.s32.totalorder %s25, 0
          %s548 = scalar_select %p547, %s25, 0
          %s549 = smul.addr %s548, 8
          %s550 = scalar_lea.vmem %s7, %s549
        $region72: #{model_forward.1} parent=47 // pred_fallthru
          _
      $region48: #{model_forward.1} parent=5 // pred_fallthru
        _
      %p551 = scmp.le.s32.totalorder 2, %s16
      // Predicated region
      $region73: #{model_forward.1} parent=5 // pred_check
        %p552 = pneg %p551
      $region74: #{model_forward.1} parent=5 // pred_check_branch
        %554 = sbr.rel (%p552) target = $region76
      $region75: #{model_forward.1} parent=5 // pred_region
        %s555 = ssub.s32 %s16, 2
      $region76: #{model_forward.1} parent=5 // pred_fallthru
        _
    $region6: #{model_forward.1} parent=1 // loop_footer
      %s20 = sadd.s32 1, %s16
    $region7: #{model_forward.1} parent=1 // loop_footer_branch
      %15 = sbr.rel target = $region3
    $region8: #{model_forward.1} parent=1 // loop_exit
      _
    %556 = vsyncpa [#allocation5], 1
    %s557 = scalar_lea.sflag [#allocation5], 1
    %558 = vsyncpa %s557, 1

</llo_original>
